<compile_context>
chip_gen: v7x
topology: tpu7x:2x2x1
jax: 0.10.0
libtpu: 0.0.40
codegen_flags: <defaults>
</compile_context>

<pallas_src>
import jax
import jax.numpy as jnp
from jax.experimental import pallas as pl
from jax.experimental.pallas import tpu as pltpu

C = 320  # fixed by nn.Linear(320, 1)
_MIB = 1024 * 1024


def _chip_config():
    """Return (physical VMEM bytes, TensorCores per chip) with safe fallbacks."""
    vmem = None
    try:
        info = pltpu.get_tpu_info()
        v = int(getattr(info, "vmem_capacity_bytes", 0) or 0)
        if v > 0:
            vmem = v
    except Exception:
        vmem = None
    kind = ""
    try:
        kind = str(jax.devices()[0].device_kind).lower()
    except Exception:
        kind = ""
    if vmem is None:
        vmem = 64 * _MIB if "v7" in kind else 128 * _MIB
    cores = 2 if ("v7" in kind or vmem <= 64 * _MIB) else 1
    return vmem, cores


def _fused_attention_kernel(x_ref, w_ref, o_ref):
    # x_ref: (TB, C, L) native dtype; w_ref: (1, C, 1) f32; o_ref: (TB, C, L)
    x = x_ref[...]
    w = w_ref[...]
    # Channel (sublane) reduction on the VPU/XLU with f32 accumulation (the
    # f32 weight promotes the product).  No MXU involvement.
    logits = jnp.sum(x * w, axis=1, keepdims=True)            # (TB, 1, L) f32
    # Numerically stable softmax over the sequence (lane) axis.
    m = jnp.max(logits, axis=-1, keepdims=True)               # (TB, 1, 1)
    e = jnp.exp(logits - m)                                    # (TB, 1, L)
    attn = e * pl.reciprocal(jnp.sum(e, axis=-1, keepdims=True), approx=False)
    # Multiply with attn kept in f32; cast only at the store.
    o_ref[...] = (x * attn).astype(o_ref.dtype)


def _logits_kernel(x_ref, w_ref, o_ref):
    # x_ref: (1, C, TL); w_ref: (1, C, 1) f32; o_ref: (1, 1, TL) f32
    o_ref[...] = jnp.sum(x_ref[...] * w_ref[...], axis=1, keepdims=True)


def _apply_kernel(x_ref, a_ref, o_ref):
    # x_ref: (1, C, TL); a_ref: (1, 1, TL) f32; o_ref: (1, C, TL)
    o_ref[...] = (x_ref[...] * a_ref[...]).astype(o_ref.dtype)


def attention_forward(x, weight, bias):
    """x: (B, 320, L); weight: (1, 320); bias: (1,). Returns (B, 320, L).

    `bias` is accepted for API parity with nn.Linear(320, 1) but unused:
    softmax(w.x + b) == softmax(w.x) for a scalar b broadcast over L.
    """
    del bias
    B, Cin, L = x.shape
    assert Cin == C

    vmem, cores = _chip_config()
    if vmem >= 100 * _MIB:          # v5e / v6e: 128 MiB physical VMEM
        budget, limit_cap = 96 * _MIB, 104 * _MIB
    else:                           # v7x: 64 MiB physical VMEM
        budget, limit_cap = 40 * _MIB, 48 * _MIB

    itemsize = jnp.dtype(x.dtype).itemsize
    row_bytes = C * L * itemsize
    f32_row_bytes = C * L * 4
    # Residency per batch row: 2x in + 2x out double-buffered tiles plus up to
    # two f32 tile-sized temporaries (product / final multiply).
    per_row_cost = 4 * row_bytes + 2 * f32_row_bytes

    w3 = weight.reshape(1, C, 1).astype(jnp.float32)

    if per_row_cost <= budget:
        # ---- fused single-pass path: whole rows fit in VMEM ----
        tb = min(B, budget // per_row_cost)
        if cores >= 2:
            # >= 2 grid steps per TensorCore (when B allows) so each core's
            # BlockSpec pipeline overlaps prefetch / compute / writeback.
            tb = min(tb, max(1, B // (2 * cores)))
        tb = int(max(1, tb))
        # NOTE: when B % tb != 0 the padded rows of the final block run a
        # softmax on unread data; the writes are discarded so results are
        # correct, but it may trip interpret-mode NaN checks.

        cost = pl.CostEstimate(
            flops=int(3 * B * C * L),
            transcendentals=int(B * L),
            bytes_accessed=int(2 * B * C * L * itemsize),
        )
        return pl.pallas_call(
            _fused_attention_kernel,
            out_shape=jax.ShapeDtypeStruct((B, C, L), x.dtype),
            grid_spec=pltpu.PrefetchScalarGridSpec(
                num_scalar_prefetch=0,
                grid=(pl.cdiv(B, tb),),
                in_specs=[
                    pl.BlockSpec((tb, C, L), lambda b: (b, 0, 0)),
                    pl.BlockSpec((1, C, 1), lambda b: (0, 0, 0)),
                ],
                out_specs=pl.BlockSpec((tb, C, L), lambda b: (b, 0, 0)),
            ),
            compiler_params=pltpu.CompilerParams(
                dimension_semantics=("parallel",),
                vmem_limit_bytes=int(limit_cap),
            ),
            cost_estimate=cost,
        )(x, w3)

    # ---- large-L fallback: L-tiled two-pass path (one row doesn't fit) ----
    TL = 2048
    nl = pl.cdiv(L, TL)

    logits = pl.pallas_call(
        _logits_kernel,
        out_shape=jax.ShapeDtypeStruct((B, 1, L), jnp.float32),
        grid_spec=pltpu.PrefetchScalarGridSpec(
            num_scalar_prefetch=0,
            grid=(B, nl),
            in_specs=[
                pl.BlockSpec((1, C, TL), lambda b, l: (b, 0, l)),
                pl.BlockSpec((1, C, 1), lambda b, l: (0, 0, 0)),
            ],
            out_specs=pl.BlockSpec((1, 1, TL), lambda b, l: (b, 0, l)),
        ),
        compiler_params=pltpu.CompilerParams(
            dimension_semantics=("parallel", "parallel"),
            vmem_limit_bytes=int(limit_cap),
        ),
        cost_estimate=pl.CostEstimate(
            flops=int(2 * B * C * L),
            transcendentals=0,
            bytes_accessed=int(B * C * L * itemsize + B * L * 4),
        ),
    )(x, w3)

    # Softmax over the tiny (B, 1, L) logits; negligible next to x traffic.
    attn = jax.nn.softmax(logits, axis=-1)

    return pl.pallas_call(
        _apply_kernel,
        out_shape=jax.ShapeDtypeStruct((B, C, L), x.dtype),
        grid_spec=pltpu.PrefetchScalarGridSpec(
            num_scalar_prefetch=0,
            grid=(B, nl),
            in_specs=[
                pl.BlockSpec((1, C, TL), lambda b, l: (b, 0, l)),
                pl.BlockSpec((1, 1, TL), lambda b, l: (b, 0, l)),
            ],
            out_specs=pl.BlockSpec((1, C, TL), lambda b, l: (b, 0, l)),
        ),
        compiler_params=pltpu.CompilerParams(
            dimension_semantics=("parallel", "parallel"),
            vmem_limit_bytes=int(limit_cap),
        ),
        cost_estimate=pl.CostEstimate(
            flops=int(B * C * L),
            transcendentals=0,
            bytes_accessed=int(2 * B * C * L * itemsize + B * L * 4),
        ),
    )(x, attn)


def attention_reference(x, weight, bias):
    # plain-JAX reference of the PyTorch forward (bias included for fidelity)
    logits = jnp.einsum("bcl,c->bl", x, weight.reshape(C)) + bias[0]  # (B, L)
    attn = jax.nn.softmax(logits, axis=-1)                            # (B, L)
    return x * attn[:, None, :]


if __name__ == "__main__":
    key = jax.random.PRNGKey(0)
    kx, kw, kb = jax.random.split(key, 3)

    B, L = 2, 16
    x = jax.random.normal(kx, (B, C, L), dtype=jnp.float32)

    # deterministic "Linear(320, 1)" parameters (PyTorch-style uniform bound)
    bound = 1.0 / jnp.sqrt(jnp.float32(C))
    weight = jax.random.uniform(kw, (1, C), jnp.float32, -bound, bound)
    bias = jax.random.uniform(kb, (1,), jnp.float32, -bound, bound)

    out = jax.block_until_ready(attention_forward(x, weight, bias))

    ref = attention_reference(x, weight, bias)
    assert out.shape == (B, C, L)
    assert jnp.allclose(out, ref, atol=1e-5, rtol=1e-5), "mismatch vs reference"

    print("KERNEL_OK")
</pallas_src>

<mosaic_0001>
module attributes {stable_mosaic.version = 11 : i64} {
  func.func @_fused_attention_kernel(%arg0: i32, %arg1: memref<2x320x16xf32, #tpu.memory_space<vmem>>, %arg2: memref<1x320x1xf32, #tpu.memory_space<vmem>>, %arg3: memref<2x320x16xf32, #tpu.memory_space<vmem>>) attributes {dimension_semantics = [#tpu.dimension_semantics<parallel>], iteration_bounds = array<i64: 1>, scalar_prefetch = 0 : i64, scratch_operands = 0 : i64, tpu.core_type = #tpu.core_type<tc>, window_params = [{transform_indices = @transform_0, window_bounds = array<i64: 2, 320, 16>}, {pipeline_mode = #tpu.pipeline_mode<synchronous>, transform_indices = @transform_1, window_bounds = array<i64: 1, 320, 1>}, {transform_indices = @transform_2, window_bounds = array<i64: 2, 320, 16>}]} {
    %c0 = arith.constant 0 : index
    %c0_0 = arith.constant 0 : index
    %c0_1 = arith.constant 0 : index
    %0 = vector.load %arg1[%c0, %c0_0, %c0_1] : memref<2x320x16xf32, #tpu.memory_space<vmem>>, vector<2x320x16xf32>
    %c0_2 = arith.constant 0 : index
    %c0_3 = arith.constant 0 : index
    %c0_4 = arith.constant 0 : index
    %1 = vector.load %arg2[%c0_2, %c0_3, %c0_4] : memref<1x320x1xf32, #tpu.memory_space<vmem>>, vector<1x320x1xf32>
    %2 = vector.broadcast %1 : vector<1x320x1xf32> to vector<2x320x16xf32>
    %3 = arith.mulf %0, %2 : vector<2x320x16xf32>
    %cst = arith.constant dense<0.000000e+00> : vector<2x16xf32>
    %4 = vector.multi_reduction <add>, %3, %cst [1] : vector<2x320x16xf32> to vector<2x16xf32>
    %5 = vector.shape_cast %4 : vector<2x16xf32> to vector<2x1x16xf32>
    %cst_5 = arith.constant dense<0xFF800000> : vector<2x1xf32>
    %6 = vector.multi_reduction <maximumf>, %5, %cst_5 [2] : vector<2x1x16xf32> to vector<2x1xf32>
    %7 = vector.shape_cast %6 : vector<2x1xf32> to vector<2x1x1xf32>
    %8 = vector.broadcast %7 : vector<2x1x1xf32> to vector<2x1x16xf32>
    %9 = arith.subf %5, %8 : vector<2x1x16xf32>
    %10 = math.exp %9 : vector<2x1x16xf32>
    %cst_6 = arith.constant dense<0.000000e+00> : vector<2x1xf32>
    %11 = vector.multi_reduction <add>, %10, %cst_6 [2] : vector<2x1x16xf32> to vector<2x1xf32>
    %12 = vector.shape_cast %11 : vector<2x1xf32> to vector<2x1x1xf32>
    %13 = tpu.reciprocal %12 : vector<2x1x1xf32> -> vector<2x1x1xf32>
    %14 = vector.broadcast %13 : vector<2x1x1xf32> to vector<2x1x16xf32>
    %15 = arith.mulf %10, %14 : vector<2x1x16xf32>
    %16 = vector.broadcast %15 : vector<2x1x16xf32> to vector<2x320x16xf32>
    %17 = arith.mulf %0, %16 : vector<2x320x16xf32>
    %c0_7 = arith.constant 0 : index
    %c0_8 = arith.constant 0 : index
    %c0_9 = arith.constant 0 : index
    %18 = vector.load %arg3[%c0_7, %c0_8, %c0_9] : memref<2x320x16xf32, #tpu.memory_space<vmem>>, vector<2x320x16xf32>
    tpu.vector_store %arg3[%c0_7, %c0_8, %c0_9], %17 {strides = array<i32>} : memref<2x320x16xf32, #tpu.memory_space<vmem>>, vector<2x320x16xf32>,
    return
  }
  func.func @transform_0(%arg0: i32) -> (i32, i32, i32) {
    %c0_i32 = arith.constant 0 : i32
    %c0_i32_0 = arith.constant 0 : i32
    %c0_i32_1 = arith.constant 0 : i32
    return %arg0, %c0_i32, %c0_i32_0 : i32, i32, i32
  }
  func.func @transform_1(%arg0: i32) -> (i32, i32, i32) {
    %c0_i32 = arith.constant 0 : i32
    %c0_i32_0 = arith.constant 0 : i32
    %c0_i32_1 = arith.constant 0 : i32
    %c0_i32_2 = arith.constant 0 : i32
    return %c0_i32, %c0_i32_0, %c0_i32_1 : i32, i32, i32
  }
  func.func @transform_2(%arg0: i32) -> (i32, i32, i32) {
    %c0_i32 = arith.constant 0 : i32
    %c0_i32_0 = arith.constant 0 : i32
    %c0_i32_1 = arith.constant 0 : i32
    return %arg0, %c0_i32, %c0_i32_0 : i32, i32, i32
  }
}

</mosaic_0001>

<llo_original>
// kernel: tpu_custom_call.1
$region0: #{tpu_custom_call.1}
  #allocation0 [shape = 'u32[]', space=smem, size = 0x4, offset = 0x4, fixed_abs, tag = 'smem constant byte address 0x4 - core index']
  #allocation1 [shape = 'u32[144,128]{1,0:T(1,128)}', space=vmem, size = 0x12000, scoped, tag = 'internal scratch']
  %s0 = inlined_call_operand.hbm [shape: f32[2,320,16], index: 0, kind: input, shape index: {}]
  %s1 = inlined_call_operand.hbm [shape: f32[1,320,1], index: 1, kind: input, shape index: {}]
  %s2 = inlined_call_operand.hbm [shape: f32[2,320,16], index: 2, kind: output, shape index: {}]
  %s3 = sld [smem:[#allocation0]]
  $region26: #{tpu_custom_call.1} parent=0
    _
  %s5 = ssub.s32 1, %s3
  %s6 = scalar_select 0, %s5, %s3
  $region1: #{tpu_custom_call.1} parent=0
    #allocation2 [shape = 'u8[327680]{0}', space=vmem, size = 0x50000, scoped, tag = 'input window, operand 0, single buffered']
    #allocation3 [shape = 's32[1]{0}', space=sflag, size = 0x4, scoped, tag = 'scoped memory for tpu_custom_call.1']
    #allocation4 [shape = 's32[1]{0}', space=sflag, size = 0x4, scoped, tag = 'scoped memory for tpu_custom_call.1']
    #allocation5 [shape = 'u8[163840]{0}', space=vmem, size = 0x28000, scoped, tag = 'input window, operand 1, single buffered']
    #allocation6 [shape = 's32[1]{0}', space=sflag, size = 0x4, scoped, tag = 'scoped memory for tpu_custom_call.1']
    #allocation7 [shape = 'u8[327680]{0}', space=vmem, size = 0x50000, scoped, tag = 'output window, operand 0, single buffered']
    %7 = vsyncpa [#allocation3], 0
    %8 = vsyncpa [#allocation6], 0
    %9 = vsyncpa [#allocation4], 0
    // Predicated region
    $region2: #{tpu_custom_call.1} parent=1 // pred_check
      _
    $region3: #{tpu_custom_call.1} parent=1 // pred_check_branch
      %11 = sbr.rel (0) target = $region5
    $region4: #{tpu_custom_call.1} parent=1 // pred_region
      %s13 = ssub.s32 10240, 10240
      %14 = vsyncadd [#allocation3], %s13
      %s15 = sshll.u32 [#allocation2], 4
      %s16 = int_to_ptr.vmem [resolvable:$true] %s15
      %21 = dma.hbm_to_vmem [thread:$0]  %s0, 10240, %s16, [#allocation3], 128, 128, 8
    $region5: #{tpu_custom_call.1} parent=1 // pred_fallthru
      _
    // Predicated region
    $region6: #{tpu_custom_call.1} parent=1 // pred_check
      _
    $region7: #{tpu_custom_call.1} parent=1 // pred_check_branch
      %23 = sbr.rel (0) target = $region9
    $region8: #{tpu_custom_call.1} parent=1 // pred_region
      %s25 = ssub.s32 5120, 5120
      %26 = vsyncadd [#allocation6], %s25
      %s27 = sshll.u32 [#allocation5], 4
      %s28 = int_to_ptr.vmem [resolvable:$true] %s27
      %33 = dma.hbm_to_vmem [thread:$0]  %s1, 5120, %s28, [#allocation6], 128, 128, 8
    $region9: #{tpu_custom_call.1} parent=1 // pred_fallthru
      _
    // Predicated region
    $region10: #{tpu_custom_call.1} parent=1 // pred_check
      _
    $region11: #{tpu_custom_call.1} parent=1 // pred_check_branch
      %35 = sbr.rel (0) target = $region13
    $region12: #{tpu_custom_call.1} parent=1 // pred_region
      %36 = dma.done [#allocation3], 10240
    $region13: #{tpu_custom_call.1} parent=1 // pred_fallthru
      _
    // Predicated region
    $region14: #{tpu_custom_call.1} parent=1 // pred_check
      _
    $region15: #{tpu_custom_call.1} parent=1 // pred_check_branch
      %38 = sbr.rel (0) target = $region17
    $region16: #{tpu_custom_call.1} parent=1 // pred_region
      %39 = dma.done [#allocation6], 5120
    $region17: #{tpu_custom_call.1} parent=1 // pred_fallthru
      _
    %v40 = vld [vmem:[#allocation2] sm:$0xff]
    %v41 = vld [vmem:[#allocation2 + $0x8] sm:$0xff]
    %v42 = vld [vmem:[#allocation2 + $0x10] sm:$0xff]
    %v43 = vld [vmem:[#allocation2 + $0x18] sm:$0xff]
    %v44 = vld [vmem:[#allocation2 + $0x20] sm:$0xff]
    %v45 = vld [vmem:[#allocation2 + $0x28] sm:$0xff]
    %v46 = vld [vmem:[#allocation2 + $0x30] sm:$0xff]
    %v47 = vld [vmem:[#allocation2 + $0x38] sm:$0xff]
    %v48 = vld [vmem:[#allocation2 + $0x40] sm:$0xff]
    %v49 = vld [vmem:[#allocation2 + $0x48] sm:$0xff]
    %v50 = vld [vmem:[#allocation2 + $0x50] sm:$0xff]
    %v51 = vld [vmem:[#allocation2 + $0x58] sm:$0xff]
    %v52 = vld [vmem:[#allocation2 + $0x60] sm:$0xff]
    %v53 = vld [vmem:[#allocation2 + $0x68] sm:$0xff]
    %v54 = vld [vmem:[#allocation2 + $0x70] sm:$0xff]
    %v55 = vld [vmem:[#allocation2 + $0x78] sm:$0xff]
    %v56 = vld [vmem:[#allocation2 + $0x80] sm:$0xff]
    %v57 = vld [vmem:[#allocation2 + $0x88] sm:$0xff]
    %v58 = vld [vmem:[#allocation2 + $0x90] sm:$0xff]
    %v59 = vld [vmem:[#allocation2 + $0x98] sm:$0xff]
    %v60 = vld [vmem:[#allocation2 + $0xa0] sm:$0xff]
    %v61 = vld [vmem:[#allocation2 + $0xa8] sm:$0xff]
    %v62 = vld [vmem:[#allocation2 + $0xb0] sm:$0xff]
    %v63 = vld [vmem:[#allocation2 + $0xb8] sm:$0xff]
    %v64 = vld [vmem:[#allocation2 + $0xc0] sm:$0xff]
    %v65 = vld [vmem:[#allocation2 + $0xc8] sm:$0xff]
    %v66 = vld [vmem:[#allocation2 + $0xd0] sm:$0xff]
    %v67 = vld [vmem:[#allocation2 + $0xd8] sm:$0xff]
    %v68 = vld [vmem:[#allocation2 + $0xe0] sm:$0xff]
    %v69 = vld [vmem:[#allocation2 + $0xe8] sm:$0xff]
    %v70 = vld [vmem:[#allocation2 + $0xf0] sm:$0xff]
    %v71 = vld [vmem:[#allocation2 + $0xf8] sm:$0xff]
    %v72 = vld [vmem:[#allocation2 + $0x100] sm:$0xff]
    %v73 = vld [vmem:[#allocation2 + $0x108] sm:$0xff]
    %v74 = vld [vmem:[#allocation2 + $0x110] sm:$0xff]
    %v75 = vld [vmem:[#allocation2 + $0x118] sm:$0xff]
    %v76 = vld [vmem:[#allocation2 + $0x120] sm:$0xff]
    %v77 = vld [vmem:[#allocation2 + $0x128] sm:$0xff]
    %v78 = vld [vmem:[#allocation2 + $0x130] sm:$0xff]
    %v79 = vld [vmem:[#allocation2 + $0x138] sm:$0xff]
    %v80 = vld [vmem:[#allocation2 + $0x140] sm:$0xff]
    %v81 = vld [vmem:[#allocation2 + $0x148] sm:$0xff]
    %v82 = vld [vmem:[#allocation2 + $0x150] sm:$0xff]
    %v83 = vld [vmem:[#allocation2 + $0x158] sm:$0xff]
    %v84 = vld [vmem:[#allocation2 + $0x160] sm:$0xff]
    %v85 = vld [vmem:[#allocation2 + $0x168] sm:$0xff]
    %v86 = vld [vmem:[#allocation2 + $0x170] sm:$0xff]
    %v87 = vld [vmem:[#allocation2 + $0x178] sm:$0xff]
    %v88 = vld [vmem:[#allocation2 + $0x180] sm:$0xff]
    %v89 = vld [vmem:[#allocation2 + $0x188] sm:$0xff]
    %v90 = vld [vmem:[#allocation2 + $0x190] sm:$0xff]
    %v91 = vld [vmem:[#allocation2 + $0x198] sm:$0xff]
    %v92 = vld [vmem:[#allocation2 + $0x1a0] sm:$0xff]
    %v93 = vld [vmem:[#allocation2 + $0x1a8] sm:$0xff]
    %v94 = vld [vmem:[#allocation2 + $0x1b0] sm:$0xff]
    %v95 = vld [vmem:[#allocation2 + $0x1b8] sm:$0xff]
    %v96 = vld [vmem:[#allocation2 + $0x1c0] sm:$0xff]
    %v97 = vld [vmem:[#allocation2 + $0x1c8] sm:$0xff]
    %v98 = vld [vmem:[#allocation2 + $0x1d0] sm:$0xff]
    %v99 = vld [vmem:[#allocation2 + $0x1d8] sm:$0xff]
    %v100 = vld [vmem:[#allocation2 + $0x1e0] sm:$0xff]
    %v101 = vld [vmem:[#allocation2 + $0x1e8] sm:$0xff]
    %v102 = vld [vmem:[#allocation2 + $0x1f0] sm:$0xff]
    %v103 = vld [vmem:[#allocation2 + $0x1f8] sm:$0xff]
    %v104 = vld [vmem:[#allocation2 + $0x200] sm:$0xff]
    %v105 = vld [vmem:[#allocation2 + $0x208] sm:$0xff]
    %v106 = vld [vmem:[#allocation2 + $0x210] sm:$0xff]
    %v107 = vld [vmem:[#allocation2 + $0x218] sm:$0xff]
    %v108 = vld [vmem:[#allocation2 + $0x220] sm:$0xff]
    %v109 = vld [vmem:[#allocation2 + $0x228] sm:$0xff]
    %v110 = vld [vmem:[#allocation2 + $0x230] sm:$0xff]
    %v111 = vld [vmem:[#allocation2 + $0x238] sm:$0xff]
    %v112 = vld [vmem:[#allocation2 + $0x240] sm:$0xff]
    %v113 = vld [vmem:[#allocation2 + $0x248] sm:$0xff]
    %v114 = vld [vmem:[#allocation2 + $0x250] sm:$0xff]
    %v115 = vld [vmem:[#allocation2 + $0x258] sm:$0xff]
    %v116 = vld [vmem:[#allocation2 + $0x260] sm:$0xff]
    %v117 = vld [vmem:[#allocation2 + $0x268] sm:$0xff]
    %v118 = vld [vmem:[#allocation2 + $0x270] sm:$0xff]
    %v119 = vld [vmem:[#allocation2 + $0x278] sm:$0xff]
    %v120 = vld [vmem:[#allocation5] sm:$0xff]
    %v121 = vld [vmem:[#allocation5 + $0x8] sm:$0xff]
    %v122 = vld [vmem:[#allocation5 + $0x10] sm:$0xff]
    %v123 = vld [vmem:[#allocation5 + $0x18] sm:$0xff]
    %v124 = vld [vmem:[#allocation5 + $0x20] sm:$0xff]
    %v125 = vld [vmem:[#allocation5 + $0x28] sm:$0xff]
    %v126 = vld [vmem:[#allocation5 + $0x30] sm:$0xff]
    %v127 = vld [vmem:[#allocation5 + $0x38] sm:$0xff]
    %v128 = vld [vmem:[#allocation5 + $0x40] sm:$0xff]
    %v129 = vld [vmem:[#allocation5 + $0x48] sm:$0xff]
    %v130 = vld [vmem:[#allocation5 + $0x50] sm:$0xff]
    %v131 = vld [vmem:[#allocation5 + $0x58] sm:$0xff]
    %v132 = vld [vmem:[#allocation5 + $0x60] sm:$0xff]
    %v133 = vld [vmem:[#allocation5 + $0x68] sm:$0xff]
    %v134 = vld [vmem:[#allocation5 + $0x70] sm:$0xff]
    %v135 = vld [vmem:[#allocation5 + $0x78] sm:$0xff]
    %v136 = vld [vmem:[#allocation5 + $0x80] sm:$0xff]
    %v137 = vld [vmem:[#allocation5 + $0x88] sm:$0xff]
    %v138 = vld [vmem:[#allocation5 + $0x90] sm:$0xff]
    %v139 = vld [vmem:[#allocation5 + $0x98] sm:$0xff]
    %v140 = vld [vmem:[#allocation5 + $0xa0] sm:$0xff]
    %v141 = vld [vmem:[#allocation5 + $0xa8] sm:$0xff]
    %v142 = vld [vmem:[#allocation5 + $0xb0] sm:$0xff]
    %v143 = vld [vmem:[#allocation5 + $0xb8] sm:$0xff]
    %v144 = vld [vmem:[#allocation5 + $0xc0] sm:$0xff]
    %v145 = vld [vmem:[#allocation5 + $0xc8] sm:$0xff]
    %v146 = vld [vmem:[#allocation5 + $0xd0] sm:$0xff]
    %v147 = vld [vmem:[#allocation5 + $0xd8] sm:$0xff]
    %v148 = vld [vmem:[#allocation5 + $0xe0] sm:$0xff]
    %v149 = vld [vmem:[#allocation5 + $0xe8] sm:$0xff]
    %v150 = vld [vmem:[#allocation5 + $0xf0] sm:$0xff]
    %v151 = vld [vmem:[#allocation5 + $0xf8] sm:$0xff]
    %v152 = vld [vmem:[#allocation5 + $0x100] sm:$0xff]
    %v153 = vld [vmem:[#allocation5 + $0x108] sm:$0xff]
    %v154 = vld [vmem:[#allocation5 + $0x110] sm:$0xff]
    %v155 = vld [vmem:[#allocation5 + $0x118] sm:$0xff]
    %v156 = vld [vmem:[#allocation5 + $0x120] sm:$0xff]
    %v157 = vld [vmem:[#allocation5 + $0x128] sm:$0xff]
    %v158 = vld [vmem:[#allocation5 + $0x130] sm:$0xff]
    %v159 = vld [vmem:[#allocation5 + $0x138] sm:$0xff]
    %161 = vset.pattern.permute.xlu0 0
    %162 = vperm.xlu0 %161, %v120
    %v163 = vpop.permute.xlu0 %162
    %166 = vset.pattern.permute.xlu0 0
    %167 = vperm.xlu0 %166, %v121
    %v168 = vpop.permute.xlu0 %167
    %171 = vset.pattern.permute.xlu0 0
    %172 = vperm.xlu0 %171, %v122
    %v173 = vpop.permute.xlu0 %172
    %176 = vset.pattern.permute.xlu0 0
    %177 = vperm.xlu0 %176, %v123
    %v178 = vpop.permute.xlu0 %177
    %181 = vset.pattern.permute.xlu0 0
    %182 = vperm.xlu0 %181, %v124
    %v183 = vpop.permute.xlu0 %182
    %186 = vset.pattern.permute.xlu0 0
    %187 = vperm.xlu0 %186, %v125
    %v188 = vpop.permute.xlu0 %187
    %191 = vset.pattern.permute.xlu0 0
    %192 = vperm.xlu0 %191, %v126
    %v193 = vpop.permute.xlu0 %192
    %196 = vset.pattern.permute.xlu0 0
    %197 = vperm.xlu0 %196, %v127
    %v198 = vpop.permute.xlu0 %197
    %201 = vset.pattern.permute.xlu0 0
    %202 = vperm.xlu0 %201, %v128
    %v203 = vpop.permute.xlu0 %202
    %206 = vset.pattern.permute.xlu0 0
    %207 = vperm.xlu0 %206, %v129
    %v208 = vpop.permute.xlu0 %207
    %211 = vset.pattern.permute.xlu0 0
    %212 = vperm.xlu0 %211, %v130
    %v213 = vpop.permute.xlu0 %212
    %216 = vset.pattern.permute.xlu0 0
    %217 = vperm.xlu0 %216, %v131
    %v218 = vpop.permute.xlu0 %217
    %221 = vset.pattern.permute.xlu0 0
    %222 = vperm.xlu0 %221, %v132
    %v223 = vpop.permute.xlu0 %222
    %226 = vset.pattern.permute.xlu0 0
    %227 = vperm.xlu0 %226, %v133
    %v228 = vpop.permute.xlu0 %227
    %231 = vset.pattern.permute.xlu0 0
    %232 = vperm.xlu0 %231, %v134
    %v233 = vpop.permute.xlu0 %232
    %236 = vset.pattern.permute.xlu0 0
    %237 = vperm.xlu0 %236, %v135
    %v238 = vpop.permute.xlu0 %237
    %241 = vset.pattern.permute.xlu0 0
    %242 = vperm.xlu0 %241, %v136
    %v243 = vpop.permute.xlu0 %242
    %246 = vset.pattern.permute.xlu0 0
    %247 = vperm.xlu0 %246, %v137
    %v248 = vpop.permute.xlu0 %247
    %251 = vset.pattern.permute.xlu0 0
    %252 = vperm.xlu0 %251, %v138
    %v253 = vpop.permute.xlu0 %252
    %256 = vset.pattern.permute.xlu0 0
    %257 = vperm.xlu0 %256, %v139
    %v258 = vpop.permute.xlu0 %257
    %261 = vset.pattern.permute.xlu0 0
    %262 = vperm.xlu0 %261, %v140
    %v263 = vpop.permute.xlu0 %262
    %266 = vset.pattern.permute.xlu0 0
    %267 = vperm.xlu0 %266, %v141
    %v268 = vpop.permute.xlu0 %267
    %271 = vset.pattern.permute.xlu0 0
    %272 = vperm.xlu0 %271, %v142
    %v273 = vpop.permute.xlu0 %272
    %276 = vset.pattern.permute.xlu0 0
    %277 = vperm.xlu0 %276, %v143
    %v278 = vpop.permute.xlu0 %277
    %281 = vset.pattern.permute.xlu0 0
    %282 = vperm.xlu0 %281, %v144
    %v283 = vpop.permute.xlu0 %282
    %286 = vset.pattern.permute.xlu0 0
    %287 = vperm.xlu0 %286, %v145
    %v288 = vpop.permute.xlu0 %287
    %291 = vset.pattern.permute.xlu0 0
    %292 = vperm.xlu0 %291, %v146
    %v293 = vpop.permute.xlu0 %292
    %296 = vset.pattern.permute.xlu0 0
    %297 = vperm.xlu0 %296, %v147
    %v298 = vpop.permute.xlu0 %297
    %301 = vset.pattern.permute.xlu0 0
    %302 = vperm.xlu0 %301, %v148
    %v303 = vpop.permute.xlu0 %302
    %306 = vset.pattern.permute.xlu0 0
    %307 = vperm.xlu0 %306, %v149
    %v308 = vpop.permute.xlu0 %307
    %311 = vset.pattern.permute.xlu0 0
    %312 = vperm.xlu0 %311, %v150
    %v313 = vpop.permute.xlu0 %312
    %316 = vset.pattern.permute.xlu0 0
    %317 = vperm.xlu0 %316, %v151
    %v318 = vpop.permute.xlu0 %317
    %321 = vset.pattern.permute.xlu0 0
    %322 = vperm.xlu0 %321, %v152
    %v323 = vpop.permute.xlu0 %322
    %326 = vset.pattern.permute.xlu0 0
    %327 = vperm.xlu0 %326, %v153
    %v328 = vpop.permute.xlu0 %327
    %331 = vset.pattern.permute.xlu0 0
    %332 = vperm.xlu0 %331, %v154
    %v333 = vpop.permute.xlu0 %332
    %336 = vset.pattern.permute.xlu0 0
    %337 = vperm.xlu0 %336, %v155
    %v338 = vpop.permute.xlu0 %337
    %341 = vset.pattern.permute.xlu0 0
    %342 = vperm.xlu0 %341, %v156
    %v343 = vpop.permute.xlu0 %342
    %346 = vset.pattern.permute.xlu0 0
    %347 = vperm.xlu0 %346, %v157
    %v348 = vpop.permute.xlu0 %347
    %351 = vset.pattern.permute.xlu0 0
    %352 = vperm.xlu0 %351, %v158
    %v353 = vpop.permute.xlu0 %352
    %356 = vset.pattern.permute.xlu0 0
    %357 = vperm.xlu0 %356, %v159
    %v358 = vpop.permute.xlu0 %357
    %v360 = vmul.f32 %v40, %v163
    %v361 = vmul.f32 %v41, %v168
    %v362 = vmul.f32 %v42, %v173
    %v363 = vmul.f32 %v43, %v178
    %v364 = vmul.f32 %v44, %v183
    %v365 = vmul.f32 %v45, %v188
    %v366 = vmul.f32 %v46, %v193
    %v367 = vmul.f32 %v47, %v198
    %v368 = vmul.f32 %v48, %v203
    %v369 = vmul.f32 %v49, %v208
    %v370 = vmul.f32 %v50, %v213
    %v371 = vmul.f32 %v51, %v218
    %v372 = vmul.f32 %v52, %v223
    %v373 = vmul.f32 %v53, %v228
    %v374 = vmul.f32 %v54, %v233
    %v375 = vmul.f32 %v55, %v238
    %v376 = vmul.f32 %v56, %v243
    %v377 = vmul.f32 %v57, %v248
    %v378 = vmul.f32 %v58, %v253
    %v379 = vmul.f32 %v59, %v258
    %v380 = vmul.f32 %v60, %v263
    %v381 = vmul.f32 %v61, %v268
    %v382 = vmul.f32 %v62, %v273
    %v383 = vmul.f32 %v63, %v278
    %v384 = vmul.f32 %v64, %v283
    %v385 = vmul.f32 %v65, %v288
    %v386 = vmul.f32 %v66, %v293
    %v387 = vmul.f32 %v67, %v298
    %v388 = vmul.f32 %v68, %v303
    %v389 = vmul.f32 %v69, %v308
    %v390 = vmul.f32 %v70, %v313
    %v391 = vmul.f32 %v71, %v318
    %v392 = vmul.f32 %v72, %v323
    %v393 = vmul.f32 %v73, %v328
    %v394 = vmul.f32 %v74, %v333
    %v395 = vmul.f32 %v75, %v338
    %v396 = vmul.f32 %v76, %v343
    %v397 = vmul.f32 %v77, %v348
    %v398 = vmul.f32 %v78, %v353
    %v399 = vmul.f32 %v79, %v358
    %v400 = vmul.f32 %v80, %v163
    %v401 = vmul.f32 %v81, %v168
    %v402 = vmul.f32 %v82, %v173
    %v403 = vmul.f32 %v83, %v178
    %v404 = vmul.f32 %v84, %v183
    %v405 = vmul.f32 %v85, %v188
    %v406 = vmul.f32 %v86, %v193
    %v407 = vmul.f32 %v87, %v198
    %v408 = vmul.f32 %v88, %v203
    %v409 = vmul.f32 %v89, %v208
    %v410 = vmul.f32 %v90, %v213
    %v411 = vmul.f32 %v91, %v218
    %v412 = vmul.f32 %v92, %v223
    %v413 = vmul.f32 %v93, %v228
    %v414 = vmul.f32 %v94, %v233
    %v415 = vmul.f32 %v95, %v238
    %v416 = vmul.f32 %v96, %v243
    %v417 = vmul.f32 %v97, %v248
    %v418 = vmul.f32 %v98, %v253
    %v419 = vmul.f32 %v99, %v258
    %v420 = vmul.f32 %v100, %v263
    %v421 = vmul.f32 %v101, %v268
    %v422 = vmul.f32 %v102, %v273
    %v423 = vmul.f32 %v103, %v278
    %v424 = vmul.f32 %v104, %v283
    %v425 = vmul.f32 %v105, %v288
    %v426 = vmul.f32 %v106, %v293
    %v427 = vmul.f32 %v107, %v298
    %v428 = vmul.f32 %v108, %v303
    %v429 = vmul.f32 %v109, %v308
    %v430 = vmul.f32 %v110, %v313
    %v431 = vmul.f32 %v111, %v318
    %v432 = vmul.f32 %v112, %v323
    %v433 = vmul.f32 %v113, %v328
    %v434 = vmul.f32 %v114, %v333
    %v435 = vmul.f32 %v115, %v338
    %v436 = vmul.f32 %v116, %v343
    %v437 = vmul.f32 %v117, %v348
    %v438 = vmul.f32 %v118, %v353
    %v439 = vmul.f32 %v119, %v358
    %vm440 = vcmask 130048
    %v441 = vsel %vm440, %v360, 0.0
    %v442 = vsel %vm440, %v361, 0.0
    %v443 = vadd.f32 %v441, %v442
    %v444 = vsel %vm440, %v362, 0.0
    %v445 = vadd.f32 %v443, %v444
    %v446 = vsel %vm440, %v363, 0.0
    %v447 = vadd.f32 %v445, %v446
    %v448 = vsel %vm440, %v364, 0.0
    %v449 = vadd.f32 %v447, %v448
    %v450 = vsel %vm440, %v365, 0.0
    %v451 = vadd.f32 %v449, %v450
    %v452 = vsel %vm440, %v366, 0.0
    %v453 = vadd.f32 %v451, %v452
    %v454 = vsel %vm440, %v367, 0.0
    %v455 = vadd.f32 %v453, %v454
    %v456 = vsel %vm440, %v368, 0.0
    %v457 = vadd.f32 %v455, %v456
    %v458 = vsel %vm440, %v369, 0.0
    %v459 = vadd.f32 %v457, %v458
    %v460 = vsel %vm440, %v370, 0.0
    %v461 = vadd.f32 %v459, %v460
    %v462 = vsel %vm440, %v371, 0.0
    %v463 = vadd.f32 %v461, %v462
    %v464 = vsel %vm440, %v372, 0.0
    %v465 = vadd.f32 %v463, %v464
    %v466 = vsel %vm440, %v373, 0.0
    %v467 = vadd.f32 %v465, %v466
    %v468 = vsel %vm440, %v374, 0.0
    %v469 = vadd.f32 %v467, %v468
    %v470 = vsel %vm440, %v375, 0.0
    %v471 = vadd.f32 %v469, %v470
    %v472 = vsel %vm440, %v376, 0.0
    %v473 = vadd.f32 %v471, %v472
    %v474 = vsel %vm440, %v377, 0.0
    %v475 = vadd.f32 %v473, %v474
    %v476 = vsel %vm440, %v378, 0.0
    %v477 = vadd.f32 %v475, %v476
    %v478 = vsel %vm440, %v379, 0.0
    %v479 = vadd.f32 %v477, %v478
    %v480 = vsel %vm440, %v380, 0.0
    %v481 = vadd.f32 %v479, %v480
    %v482 = vsel %vm440, %v381, 0.0
    %v483 = vadd.f32 %v481, %v482
    %v484 = vsel %vm440, %v382, 0.0
    %v485 = vadd.f32 %v483, %v484
    %v486 = vsel %vm440, %v383, 0.0
    %v487 = vadd.f32 %v485, %v486
    %v488 = vsel %vm440, %v384, 0.0
    %v489 = vadd.f32 %v487, %v488
    %v490 = vsel %vm440, %v385, 0.0
    %v491 = vadd.f32 %v489, %v490
    %v492 = vsel %vm440, %v386, 0.0
    %v493 = vadd.f32 %v491, %v492
    %v494 = vsel %vm440, %v387, 0.0
    %v495 = vadd.f32 %v493, %v494
    %v496 = vsel %vm440, %v388, 0.0
    %v497 = vadd.f32 %v495, %v496
    %v498 = vsel %vm440, %v389, 0.0
    %v499 = vadd.f32 %v497, %v498
    %v500 = vsel %vm440, %v390, 0.0
    %v501 = vadd.f32 %v499, %v500
    %v502 = vsel %vm440, %v391, 0.0
    %v503 = vadd.f32 %v501, %v502
    %v504 = vsel %vm440, %v392, 0.0
    %v505 = vadd.f32 %v503, %v504
    %v506 = vsel %vm440, %v393, 0.0
    %v507 = vadd.f32 %v505, %v506
    %v508 = vsel %vm440, %v394, 0.0
    %v509 = vadd.f32 %v507, %v508
    %v510 = vsel %vm440, %v395, 0.0
    %v511 = vadd.f32 %v509, %v510
    %v512 = vsel %vm440, %v396, 0.0
    %v513 = vadd.f32 %v511, %v512
    %v514 = vsel %vm440, %v397, 0.0
    %v515 = vadd.f32 %v513, %v514
    %v516 = vsel %vm440, %v398, 0.0
    %v517 = vadd.f32 %v515, %v516
    %v518 = vsel %vm440, %v399, 0.0
    %v519 = vadd.f32 %v517, %v518
    %v520 = vrot.slane %v519, 4
    %v521 = vadd.f32 %v519, %v520
    %v522 = vrot.slane %v521, 2
    %v523 = vadd.f32 %v521, %v522
    %v524 = vrot.slane %v523, 1
    %v525 = vadd.f32 %v523, %v524
    %v526 = vsel %vm440, %v400, 0.0
    %v527 = vsel %vm440, %v401, 0.0
    %v528 = vadd.f32 %v526, %v527
    %v529 = vsel %vm440, %v402, 0.0
    %v530 = vadd.f32 %v528, %v529
    %v531 = vsel %vm440, %v403, 0.0
    %v532 = vadd.f32 %v530, %v531
    %v533 = vsel %vm440, %v404, 0.0
    %v534 = vadd.f32 %v532, %v533
    %v535 = vsel %vm440, %v405, 0.0
    %v536 = vadd.f32 %v534, %v535
    %v537 = vsel %vm440, %v406, 0.0
    %v538 = vadd.f32 %v536, %v537
    %v539 = vsel %vm440, %v407, 0.0
    %v540 = vadd.f32 %v538, %v539
    %v541 = vsel %vm440, %v408, 0.0
    %v542 = vadd.f32 %v540, %v541
    %v543 = vsel %vm440, %v409, 0.0
    %v544 = vadd.f32 %v542, %v543
    %v545 = vsel %vm440, %v410, 0.0
    %v546 = vadd.f32 %v544, %v545
    %v547 = vsel %vm440, %v411, 0.0
    %v548 = vadd.f32 %v546, %v547
    %v549 = vsel %vm440, %v412, 0.0
    %v550 = vadd.f32 %v548, %v549
    %v551 = vsel %vm440, %v413, 0.0
    %v552 = vadd.f32 %v550, %v551
    %v553 = vsel %vm440, %v414, 0.0
    %v554 = vadd.f32 %v552, %v553
    %v555 = vsel %vm440, %v415, 0.0
    %v556 = vadd.f32 %v554, %v555
    %v557 = vsel %vm440, %v416, 0.0
    %v558 = vadd.f32 %v556, %v557
    %v559 = vsel %vm440, %v417, 0.0
    %v560 = vadd.f32 %v558, %v559
    %v561 = vsel %vm440, %v418, 0.0
    %v562 = vadd.f32 %v560, %v561
    %v563 = vsel %vm440, %v419, 0.0
    %v564 = vadd.f32 %v562, %v563
    %v565 = vsel %vm440, %v420, 0.0
    %v566 = vadd.f32 %v564, %v565
    %v567 = vsel %vm440, %v421, 0.0
    %v568 = vadd.f32 %v566, %v567
    %v569 = vsel %vm440, %v422, 0.0
    %v570 = vadd.f32 %v568, %v569
    %v571 = vsel %vm440, %v423, 0.0
    %v572 = vadd.f32 %v570, %v571
    %v573 = vsel %vm440, %v424, 0.0
    %v574 = vadd.f32 %v572, %v573
    %v575 = vsel %vm440, %v425, 0.0
    %v576 = vadd.f32 %v574, %v575
    %v577 = vsel %vm440, %v426, 0.0
    %v578 = vadd.f32 %v576, %v577
    %v579 = vsel %vm440, %v427, 0.0
    %v580 = vadd.f32 %v578, %v579
    %v581 = vsel %vm440, %v428, 0.0
    %v582 = vadd.f32 %v580, %v581
    %v583 = vsel %vm440, %v429, 0.0
    %v584 = vadd.f32 %v582, %v583
    %v585 = vsel %vm440, %v430, 0.0
    %v586 = vadd.f32 %v584, %v585
    %v587 = vsel %vm440, %v431, 0.0
    %v588 = vadd.f32 %v586, %v587
    %v589 = vsel %vm440, %v432, 0.0
    %v590 = vadd.f32 %v588, %v589
    %v591 = vsel %vm440, %v433, 0.0
    %v592 = vadd.f32 %v590, %v591
    %v593 = vsel %vm440, %v434, 0.0
    %v594 = vadd.f32 %v592, %v593
    %v595 = vsel %vm440, %v435, 0.0
    %v596 = vadd.f32 %v594, %v595
    %v597 = vsel %vm440, %v436, 0.0
    %v598 = vadd.f32 %v596, %v597
    %v599 = vsel %vm440, %v437, 0.0
    %v600 = vadd.f32 %v598, %v599
    %v601 = vsel %vm440, %v438, 0.0
    %v602 = vadd.f32 %v600, %v601
    %v603 = vsel %vm440, %v439, 0.0
    %v604 = vadd.f32 %v602, %v603
    %v605 = vrot.slane %v604, 4
    %v606 = vadd.f32 %v604, %v605
    %v607 = vrot.slane %v606, 2
    %v608 = vadd.f32 %v606, %v607
    %v609 = vrot.slane %v608, 1
    %v610 = vadd.f32 %v608, %v609
    %v611 = vsel %vm440, %v525, -inf
    %612 = vmax.xlane.f32.xlu0 %v611
    %v613 = vpop.xlane.xlu0 %612
    %v614 = vsel %vm440, %v610, -inf
    %615 = vmax.xlane.f32.xlu0 %v614
    %v616 = vpop.xlane.xlu0 %615
    %v617 = vsub.f32 %v525, %v613
    %v618 = vsub.f32 %v610, %v616
    %v619 = vmul.f32 %v617, 1.442695
    %v620 = vpow.pop %v619
    %v621 = vmul.f32 %v618, 1.442695
    %v622 = vpow.pop %v621
    %v623 = vsel %vm440, %v620, 0.0
    %624 = vadd.xlane.f32.xlu0 %v623
    %v625 = vpop.xlane.xlu0 %624
    %v626 = vsel %vm440, %v622, 0.0
    %627 = vadd.xlane.f32.xlu0 %v626
    %v628 = vpop.xlane.xlu0 %627
    %v629 = vrcp.pop %v625
    %v630 = vrcp.pop %v628
    %v631 = vmul.f32 %v620, %v629
    %v632 = vmul.f32 %v622, %v630
    %v633 = vmul.f32 %v40, %v631
    %v634 = vmul.f32 %v41, %v631
    %v635 = vmul.f32 %v42, %v631
    %v636 = vmul.f32 %v43, %v631
    %v637 = vmul.f32 %v44, %v631
    %v638 = vmul.f32 %v45, %v631
    %v639 = vmul.f32 %v46, %v631
    %v640 = vmul.f32 %v47, %v631
    %v641 = vmul.f32 %v48, %v631
    %v642 = vmul.f32 %v49, %v631
    %v643 = vmul.f32 %v50, %v631
    %v644 = vmul.f32 %v51, %v631
    %v645 = vmul.f32 %v52, %v631
    %v646 = vmul.f32 %v53, %v631
    %v647 = vmul.f32 %v54, %v631
    %v648 = vmul.f32 %v55, %v631
    %v649 = vmul.f32 %v56, %v631
    %v650 = vmul.f32 %v57, %v631
    %v651 = vmul.f32 %v58, %v631
    %v652 = vmul.f32 %v59, %v631
    %v653 = vmul.f32 %v60, %v631
    %v654 = vmul.f32 %v61, %v631
    %v655 = vmul.f32 %v62, %v631
    %v656 = vmul.f32 %v63, %v631
    %v657 = vmul.f32 %v64, %v631
    %v658 = vmul.f32 %v65, %v631
    %v659 = vmul.f32 %v66, %v631
    %v660 = vmul.f32 %v67, %v631
    %v661 = vmul.f32 %v68, %v631
    %v662 = vmul.f32 %v69, %v631
    %v663 = vmul.f32 %v70, %v631
    %v664 = vmul.f32 %v71, %v631
    %v665 = vmul.f32 %v72, %v631
    %v666 = vmul.f32 %v73, %v631
    %v667 = vmul.f32 %v74, %v631
    %v668 = vmul.f32 %v75, %v631
    %v669 = vmul.f32 %v76, %v631
    %v670 = vmul.f32 %v77, %v631
    %v671 = vmul.f32 %v78, %v631
    %v672 = vmul.f32 %v79, %v631
    %v673 = vmul.f32 %v80, %v632
    %v674 = vmul.f32 %v81, %v632
    %v675 = vmul.f32 %v82, %v632
    %v676 = vmul.f32 %v83, %v632
    %v677 = vmul.f32 %v84, %v632
    %v678 = vmul.f32 %v85, %v632
    %v679 = vmul.f32 %v86, %v632
    %v680 = vmul.f32 %v87, %v632
    %v681 = vmul.f32 %v88, %v632
    %v682 = vmul.f32 %v89, %v632
    %v683 = vmul.f32 %v90, %v632
    %v684 = vmul.f32 %v91, %v632
    %v685 = vmul.f32 %v92, %v632
    %v686 = vmul.f32 %v93, %v632
    %v687 = vmul.f32 %v94, %v632
    %v688 = vmul.f32 %v95, %v632
    %v689 = vmul.f32 %v96, %v632
    %v690 = vmul.f32 %v97, %v632
    %v691 = vmul.f32 %v98, %v632
    %v692 = vmul.f32 %v99, %v632
    %v693 = vmul.f32 %v100, %v632
    %v694 = vmul.f32 %v101, %v632
    %v695 = vmul.f32 %v102, %v632
    %v696 = vmul.f32 %v103, %v632
    %v697 = vmul.f32 %v104, %v632
    %v698 = vmul.f32 %v105, %v632
    %v699 = vmul.f32 %v106, %v632
    %v700 = vmul.f32 %v107, %v632
    %v701 = vmul.f32 %v108, %v632
    %v702 = vmul.f32 %v109, %v632
    %v703 = vmul.f32 %v110, %v632
    %v704 = vmul.f32 %v111, %v632
    %v705 = vmul.f32 %v112, %v632
    %v706 = vmul.f32 %v113, %v632
    %v707 = vmul.f32 %v114, %v632
    %v708 = vmul.f32 %v115, %v632
    %v709 = vmul.f32 %v116, %v632
    %v710 = vmul.f32 %v117, %v632
    %v711 = vmul.f32 %v118, %v632
    %v712 = vmul.f32 %v119, %v632
    %713 = vst.msk [vmem:[#allocation7] sm:$0xff] %vm440, %v633
    %714 = vst.msk [vmem:[#allocation7 + $0x8] sm:$0xff] %vm440, %v634
    %715 = vst.msk [vmem:[#allocation7 + $0x10] sm:$0xff] %vm440, %v635
    %716 = vst.msk [vmem:[#allocation7 + $0x18] sm:$0xff] %vm440, %v636
    %717 = vst.msk [vmem:[#allocation7 + $0x20] sm:$0xff] %vm440, %v637
    %718 = vst.msk [vmem:[#allocation7 + $0x28] sm:$0xff] %vm440, %v638
    %719 = vst.msk [vmem:[#allocation7 + $0x30] sm:$0xff] %vm440, %v639
    %720 = vst.msk [vmem:[#allocation7 + $0x38] sm:$0xff] %vm440, %v640
    %721 = vst.msk [vmem:[#allocation7 + $0x40] sm:$0xff] %vm440, %v641
    %722 = vst.msk [vmem:[#allocation7 + $0x48] sm:$0xff] %vm440, %v642
    %723 = vst.msk [vmem:[#allocation7 + $0x50] sm:$0xff] %vm440, %v643
    %724 = vst.msk [vmem:[#allocation7 + $0x58] sm:$0xff] %vm440, %v644
    %725 = vst.msk [vmem:[#allocation7 + $0x60] sm:$0xff] %vm440, %v645
    %726 = vst.msk [vmem:[#allocation7 + $0x68] sm:$0xff] %vm440, %v646
    %727 = vst.msk [vmem:[#allocation7 + $0x70] sm:$0xff] %vm440, %v647
    %728 = vst.msk [vmem:[#allocation7 + $0x78] sm:$0xff] %vm440, %v648
    %729 = vst.msk [vmem:[#allocation7 + $0x80] sm:$0xff] %vm440, %v649
    %730 = vst.msk [vmem:[#allocation7 + $0x88] sm:$0xff] %vm440, %v650
    %731 = vst.msk [vmem:[#allocation7 + $0x90] sm:$0xff] %vm440, %v651
    %732 = vst.msk [vmem:[#allocation7 + $0x98] sm:$0xff] %vm440, %v652
    %733 = vst.msk [vmem:[#allocation7 + $0xa0] sm:$0xff] %vm440, %v653
    %734 = vst.msk [vmem:[#allocation7 + $0xa8] sm:$0xff] %vm440, %v654
    %735 = vst.msk [vmem:[#allocation7 + $0xb0] sm:$0xff] %vm440, %v655
    %736 = vst.msk [vmem:[#allocation7 + $0xb8] sm:$0xff] %vm440, %v656
    %737 = vst.msk [vmem:[#allocation7 + $0xc0] sm:$0xff] %vm440, %v657
    %738 = vst.msk [vmem:[#allocation7 + $0xc8] sm:$0xff] %vm440, %v658
    %739 = vst.msk [vmem:[#allocation7 + $0xd0] sm:$0xff] %vm440, %v659
    %740 = vst.msk [vmem:[#allocation7 + $0xd8] sm:$0xff] %vm440, %v660
    %741 = vst.msk [vmem:[#allocation7 + $0xe0] sm:$0xff] %vm440, %v661
    %742 = vst.msk [vmem:[#allocation7 + $0xe8] sm:$0xff] %vm440, %v662
    %743 = vst.msk [vmem:[#allocation7 + $0xf0] sm:$0xff] %vm440, %v663
    %744 = vst.msk [vmem:[#allocation7 + $0xf8] sm:$0xff] %vm440, %v664
    %745 = vst.msk [vmem:[#allocation7 + $0x100] sm:$0xff] %vm440, %v665
    %746 = vst.msk [vmem:[#allocation7 + $0x108] sm:$0xff] %vm440, %v666
    %747 = vst.msk [vmem:[#allocation7 + $0x110] sm:$0xff] %vm440, %v667
    %748 = vst.msk [vmem:[#allocation7 + $0x118] sm:$0xff] %vm440, %v668
    %749 = vst.msk [vmem:[#allocation7 + $0x120] sm:$0xff] %vm440, %v669
    %750 = vst.msk [vmem:[#allocation7 + $0x128] sm:$0xff] %vm440, %v670
    %751 = vst.msk [vmem:[#allocation7 + $0x130] sm:$0xff] %vm440, %v671
    %752 = vst.msk [vmem:[#allocation7 + $0x138] sm:$0xff] %vm440, %v672
    %753 = vst.msk [vmem:[#allocation7 + $0x140] sm:$0xff] %vm440, %v673
    %754 = vst.msk [vmem:[#allocation7 + $0x148] sm:$0xff] %vm440, %v674
    %755 = vst.msk [vmem:[#allocation7 + $0x150] sm:$0xff] %vm440, %v675
    %756 = vst.msk [vmem:[#allocation7 + $0x158] sm:$0xff] %vm440, %v676
    %757 = vst.msk [vmem:[#allocation7 + $0x160] sm:$0xff] %vm440, %v677
    %758 = vst.msk [vmem:[#allocation7 + $0x168] sm:$0xff] %vm440, %v678
    %759 = vst.msk [vmem:[#allocation7 + $0x170] sm:$0xff] %vm440, %v679
    %760 = vst.msk [vmem:[#allocation7 + $0x178] sm:$0xff] %vm440, %v680
    %761 = vst.msk [vmem:[#allocation7 + $0x180] sm:$0xff] %vm440, %v681
    %762 = vst.msk [vmem:[#allocation7 + $0x188] sm:$0xff] %vm440, %v682
    %763 = vst.msk [vmem:[#allocation7 + $0x190] sm:$0xff] %vm440, %v683
    %764 = vst.msk [vmem:[#allocation7 + $0x198] sm:$0xff] %vm440, %v684
    %765 = vst.msk [vmem:[#allocation7 + $0x1a0] sm:$0xff] %vm440, %v685
    %766 = vst.msk [vmem:[#allocation7 + $0x1a8] sm:$0xff] %vm440, %v686
    %767 = vst.msk [vmem:[#allocation7 + $0x1b0] sm:$0xff] %vm440, %v687
    %768 = vst.msk [vmem:[#allocation7 + $0x1b8] sm:$0xff] %vm440, %v688
    %769 = vst.msk [vmem:[#allocation7 + $0x1c0] sm:$0xff] %vm440, %v689
    %770 = vst.msk [vmem:[#allocation7 + $0x1c8] sm:$0xff] %vm440, %v690
    %771 = vst.msk [vmem:[#allocation7 + $0x1d0] sm:$0xff] %vm440, %v691
    %772 = vst.msk [vmem:[#allocation7 + $0x1d8] sm:$0xff] %vm440, %v692
    %773 = vst.msk [vmem:[#allocation7 + $0x1e0] sm:$0xff] %vm440, %v693
    %774 = vst.msk [vmem:[#allocation7 + $0x1e8] sm:$0xff] %vm440, %v694
    %775 = vst.msk [vmem:[#allocation7 + $0x1f0] sm:$0xff] %vm440, %v695
    %776 = vst.msk [vmem:[#allocation7 + $0x1f8] sm:$0xff] %vm440, %v696
    %777 = vst.msk [vmem:[#allocation7 + $0x200] sm:$0xff] %vm440, %v697
    %778 = vst.msk [vmem:[#allocation7 + $0x208] sm:$0xff] %vm440, %v698
    %779 = vst.msk [vmem:[#allocation7 + $0x210] sm:$0xff] %vm440, %v699
    %780 = vst.msk [vmem:[#allocation7 + $0x218] sm:$0xff] %vm440, %v700
    %781 = vst.msk [vmem:[#allocation7 + $0x220] sm:$0xff] %vm440, %v701
    %782 = vst.msk [vmem:[#allocation7 + $0x228] sm:$0xff] %vm440, %v702
    %783 = vst.msk [vmem:[#allocation7 + $0x230] sm:$0xff] %vm440, %v703
    %784 = vst.msk [vmem:[#allocation7 + $0x238] sm:$0xff] %vm440, %v704
    %785 = vst.msk [vmem:[#allocation7 + $0x240] sm:$0xff] %vm440, %v705
    %786 = vst.msk [vmem:[#allocation7 + $0x248] sm:$0xff] %vm440, %v706
    %787 = vst.msk [vmem:[#allocation7 + $0x250] sm:$0xff] %vm440, %v707
    %788 = vst.msk [vmem:[#allocation7 + $0x258] sm:$0xff] %vm440, %v708
    %789 = vst.msk [vmem:[#allocation7 + $0x260] sm:$0xff] %vm440, %v709
    %790 = vst.msk [vmem:[#allocation7 + $0x268] sm:$0xff] %vm440, %v710
    %791 = vst.msk [vmem:[#allocation7 + $0x270] sm:$0xff] %vm440, %v711
    %792 = vst.msk [vmem:[#allocation7 + $0x278] sm:$0xff] %vm440, %v712
    // Predicated region
    $region18: #{tpu_custom_call.1} parent=1 // pred_check
      _
    $region19: #{tpu_custom_call.1} parent=1 // pred_check_branch
      %794 = sbr.rel (0) target = $region21
    $region20: #{tpu_custom_call.1} parent=1 // pred_region
      %s796 = ssub.s32 10240, 10240
      %797 = vsyncadd [#allocation4], %s796
      %s798 = sshll.u32 [#allocation7], 4
      %s799 = int_to_ptr.vmem [resolvable:$true] %s798
      %804 = dma.vmem_to_hbm [thread:$0]  %s799, 10240, %s2, [#allocation4], 128, 128, 8
    $region21: #{tpu_custom_call.1} parent=1 // pred_fallthru
      _
    // Predicated region
    $region22: #{tpu_custom_call.1} parent=1 // pred_check
      _
    $region23: #{tpu_custom_call.1} parent=1 // pred_check_branch
      %806 = sbr.rel (0) target = $region25
    $region24: #{tpu_custom_call.1} parent=1 // pred_region
      %807 = dma.done [#allocation4], 10240
    $region25: #{tpu_custom_call.1} parent=1 // pred_fallthru
      _
    %808 = vsyncpa [#allocation3], 1
    %809 = vsyncpa [#allocation6], 1
    %810 = vsyncpa [#allocation4], 1

</llo_original>
